<compile_context>
chip_gen: v5e
topology: v5e:2x2
jax: 0.10.0
libtpu: 0.0.40
codegen_flags: <defaults>
</compile_context>

<pallas_src>
import functools

import jax
import jax.numpy as jnp
from jax.experimental import pallas as pl
from jax.experimental.pallas import tpu as pltpu

EPS = 1e-6
_LANES = 128
_MAX_BLOCK_ROWS = 1024
_MIN_BLOCK_ROWS = 8
_MIN_BLOCKS = 4          # minimum grid steps for pipelining / megacore sharding


def _vmem_budgets():
    """Returns (pipelined-tile byte budget, scoped vmem_limit_bytes) per TPU gen."""
    cap = 128 * 1024 * 1024
    try:
        info = pltpu.get_tpu_info()
        cap = int(getattr(info, "vmem_capacity_bytes", cap) or cap)
    except Exception:
        pass
    if cap <= 64 * 1024 * 1024:                      # v7x: 64 MiB per TensorCore
        return 20 * 1024 * 1024, 40 * 1024 * 1024
    return 32 * 1024 * 1024, 64 * 1024 * 1024        # v5e / v6e: 128 MiB


def _round_up(v, m):
    return ((v + m - 1) // m) * m


def _pick_block_rows(rows, width, itemsize, budget):
    """Largest row tile whose pipelined buffers + f32 temporaries fit `budget`."""
    # 2x in + 2x out double-buffered tiles in the HBM dtype, plus ~3 live f32
    # full-tile temporaries (f32 upcast, x*x, scaled product) that Mosaic
    # materializes in VMEM.
    bytes_per_row = (4 * itemsize + 3 * 4) * width
    tm = budget // max(bytes_per_row, 1)
    tm = max(_MIN_BLOCK_ROWS, min(_MAX_BLOCK_ROWS, (tm // 8) * 8))
    if rows >= 64:
        # Guarantee >= _MIN_BLOCKS grid steps: restores the prefetch/writeback
        # pipeline and lets the "parallel" axis shard across v7x's 2 TensorCores.
        tm = min(tm, max(_MIN_BLOCK_ROWS, _round_up(pl.cdiv(rows, _MIN_BLOCKS), 8)))
    elif rows <= tm:
        # Tiny problem: a single block covering all rows (block dim == array dim
        # is always legal regardless of divisibility by 8).
        return rows
    return tm


def _rmsnorm_kernel(x_ref, w_ref, o_ref):
    # x_ref: (tm, H) tile, w_ref: (1, H) VMEM-resident weight, o_ref: (tm, H)
    x = x_ref[...].astype(jnp.float32)
    w = w_ref[...].astype(jnp.float32)                 # broadcasts over rows
    ms = jnp.mean(x * x, axis=-1, keepdims=True)       # (tm, 1)  XLU row-reduce
    inv = jax.lax.rsqrt(ms + EPS)                      # EUP
    o_ref[...] = (x * inv * w).astype(o_ref.dtype)     # VPU + lane-dense store


def _rmsnorm_folded_kernel(norm_size, x_ref, w_ref, seg_ref, o_ref):
    # x_ref: (tm, k*H) tile with k = 128 // H rows folded into the lane axis.
    # seg_ref: (k*H, k*H) block-diagonal ones matrix (VMEM-resident).
    x = x_ref[...].astype(jnp.float32)
    # Per-segment sum of squares, broadcast back to every lane of its segment
    # by the MXU dot itself (no XLU shuffles, no masked stores).
    ss = jnp.dot(x * x, seg_ref[...], preferred_element_type=jnp.float32)
    inv = jax.lax.rsqrt(ss * (1.0 / norm_size) + EPS)
    o_ref[...] = (x * inv * w_ref[...].astype(jnp.float32)).astype(o_ref.dtype)


def rms_norm(x, weight):
    """RMSNorm over the last axis of x using a Pallas TPU kernel.

    x: (..., H) array, weight: (H,) array.
    """
    H = x.shape[-1]
    lead_shape = x.shape[:-1]
    x2d = x.reshape(-1, H)                              # metadata-only reshape
    M = x2d.shape[0]
    dt = x2d.dtype

    budget, vmem_limit = _vmem_budgets()

    # Lane folding for H < 128: fold k = 128 // H consecutive rows into the lane
    # axis so the last dim is 128-wide (lane-dense loads/stores).
    k = _LANES // H if (H < _LANES and _LANES % H == 0) else 1
    fold = k > 1 and M % k == 0
    if fold:
        width = k * H                                   # == 128
        rows = M // k
        x_in = x2d.reshape(rows, width)                 # contiguous, no HBM copy
        w_in = jnp.tile(weight.reshape(1, H), (1, k))   # (1, 128), w[j] = weight[j % H]
        seg_id = jnp.arange(width) // H
        seg = (seg_id[:, None] == seg_id[None, :]).astype(jnp.float32)  # (128, 128)
        kernel = functools.partial(_rmsnorm_folded_kernel, H)
        extra_inputs = [seg]
        extra_specs = [pl.BlockSpec((width, width), lambda i: (0, 0))]  # DMA'd once
    else:
        width = H
        rows = M
        x_in = x2d
        w_in = weight.reshape(1, H)
        kernel = _rmsnorm_kernel
        extra_inputs = []
        extra_specs = []
        # TODO(synk): for H < 128 with M % (128 // H) != 0, a padded lane-folding
        # path would still help; falling back to the masked-store path here.

    tm = _pick_block_rows(rows, width, dt.itemsize, budget)
    num_blocks = pl.cdiv(rows, tm)
    grid = (num_blocks,)                                # ragged last block is masked

    # Deeper buffering when tiles are small (forced multi-block split / v7x budget)
    # and there are enough steps for it to matter; footprint re-checked at 3 bufs.
    use_deep = (num_blocks >= 6
                and tm < 256
                and tm * (6 * dt.itemsize + 3 * 4) * width <= budget)
    if use_deep:
        x_spec = pl.BlockSpec((tm, width), lambda i: (i, 0),
                              pipeline_mode=pl.Buffered(3))
        o_spec = pl.BlockSpec((tm, width), lambda i: (i, 0),
                              pipeline_mode=pl.Buffered(3))
    else:
        x_spec = pl.BlockSpec((tm, width), lambda i: (i, 0))
        o_spec = pl.BlockSpec((tm, width), lambda i: (i, 0))

    out = pl.pallas_call(
        kernel,
        out_shape=jax.ShapeDtypeStruct((rows, width), dt),
        grid_spec=pltpu.PrefetchScalarGridSpec(
            num_scalar_prefetch=0,
            grid=grid,
            in_specs=[x_spec,
                      pl.BlockSpec((1, width), lambda i: (0, 0))]  # weight: DMA once
                     + extra_specs,
            out_specs=o_spec,
        ),
        compiler_params=pltpu.CompilerParams(
            dimension_semantics=("parallel",),           # megacore-shardable on v7x
            vmem_limit_bytes=vmem_limit,
        ),
    )(x_in, w_in, *extra_inputs)

    return out.reshape(*lead_shape, H)


if __name__ == "__main__":
    key = jax.random.PRNGKey(0)

    # Shapes consistent with the module's forward: (batch, seq, norm_size).
    batch, seq, hidden = 2, 8, 32
    x = jax.random.normal(key, (batch, seq, hidden), dtype=jnp.float32)
    weight = jnp.ones((hidden,), dtype=jnp.float32)      # RMSNorm default init

    y = rms_norm(x, weight)
    y = jax.block_until_ready(y)

    ref = x * jax.lax.rsqrt(jnp.mean(x * x, axis=-1, keepdims=True) + EPS) * weight
    assert y.shape == x.shape
    assert jnp.allclose(y, ref, atol=1e-5, rtol=1e-5)

    # Also exercise the unfolded (H >= 128) path on a tiny shape.
    hidden2 = 256
    x2 = jax.random.normal(jax.random.PRNGKey(1), (2, 8, hidden2), dtype=jnp.float32)
    w2 = jnp.ones((hidden2,), dtype=jnp.float32)
    y2 = jax.block_until_ready(rms_norm(x2, w2))
    ref2 = x2 * jax.lax.rsqrt(jnp.mean(x2 * x2, axis=-1, keepdims=True) + EPS) * w2
    assert jnp.allclose(y2, ref2, atol=1e-5, rtol=1e-5)

    print("KERNEL_OK")
</pallas_src>

<mosaic_0001>
module attributes {stable_mosaic.version = 11 : i64} {
  func.func @_rmsnorm_folded_kernel(%arg0: i32, %arg1: memref<4x128xf32, #tpu.memory_space<vmem>>, %arg2: memref<1x128xf32, #tpu.memory_space<vmem>>, %arg3: memref<128x128xf32, #tpu.memory_space<vmem>>, %arg4: memref<4x128xf32, #tpu.memory_space<vmem>>) attributes {dimension_semantics = [#tpu.dimension_semantics<parallel>], iteration_bounds = array<i64: 1>, scalar_prefetch = 0 : i64, scratch_operands = 0 : i64, tpu.core_type = #tpu.core_type<tc>, window_params = [{transform_indices = @transform_0, window_bounds = array<i64: 4, 128>}, {pipeline_mode = #tpu.pipeline_mode<synchronous>, transform_indices = @transform_1, window_bounds = array<i64: 1, 128>}, {pipeline_mode = #tpu.pipeline_mode<synchronous>, transform_indices = @transform_2, window_bounds = array<i64: 128, 128>}, {transform_indices = @transform_3, window_bounds = array<i64: 4, 128>}]} {
    %c0 = arith.constant 0 : index
    %c0_0 = arith.constant 0 : index
    %0 = vector.load %arg1[%c0, %c0_0] : memref<4x128xf32, #tpu.memory_space<vmem>>, vector<4x128xf32>
    %1 = arith.mulf %0, %0 : vector<4x128xf32>
    %c0_1 = arith.constant 0 : index
    %c0_2 = arith.constant 0 : index
    %2 = vector.load %arg3[%c0_1, %c0_2] : memref<128x128xf32, #tpu.memory_space<vmem>>, vector<128x128xf32>
    %cst = arith.constant dense<0.000000e+00> : vector<4x128xf32>
    %3 = tpu.matmul %1, %2, %cst {dimension_numbers = #tpu.dot_dimension_numbers<[1], [0], [0], [1], [0, 0, 1, 1], [], []>} : vector<4x128xf32>, vector<128x128xf32>, vector<4x128xf32> -> vector<4x128xf32>
    %cst_3 = arith.constant 3.125000e-02 : f32
    %4 = vector.broadcast %cst_3 : f32 to vector<4x128xf32>
    %5 = arith.mulf %3, %4 : vector<4x128xf32>
    %cst_4 = arith.constant 9.99999997E-7 : f32
    %6 = vector.broadcast %cst_4 : f32 to vector<4x128xf32>
    %7 = arith.addf %5, %6 : vector<4x128xf32>
    %8 = math.rsqrt %7 : vector<4x128xf32>
    %9 = arith.mulf %0, %8 : vector<4x128xf32>
    %c0_5 = arith.constant 0 : index
    %c0_6 = arith.constant 0 : index
    %10 = vector.load %arg2[%c0_5, %c0_6] : memref<1x128xf32, #tpu.memory_space<vmem>>, vector<1x128xf32>
    %11 = vector.broadcast %10 : vector<1x128xf32> to vector<4x128xf32>
    %12 = arith.mulf %9, %11 : vector<4x128xf32>
    %c0_7 = arith.constant 0 : index
    %c0_8 = arith.constant 0 : index
    %13 = vector.load %arg4[%c0_7, %c0_8] : memref<4x128xf32, #tpu.memory_space<vmem>>, vector<4x128xf32>
    tpu.vector_store %arg4[%c0_7, %c0_8], %12 {strides = array<i32>} : memref<4x128xf32, #tpu.memory_space<vmem>>, vector<4x128xf32>,
    return
  }
  func.func @transform_0(%arg0: i32) -> (i32, i32) {
    %c0_i32 = arith.constant 0 : i32
    %c0_i32_0 = arith.constant 0 : i32
    return %arg0, %c0_i32 : i32, i32
  }
  func.func @transform_1(%arg0: i32) -> (i32, i32) {
    %c0_i32 = arith.constant 0 : i32
    %c0_i32_0 = arith.constant 0 : i32
    %c0_i32_1 = arith.constant 0 : i32
    return %c0_i32, %c0_i32_0 : i32, i32
  }
  func.func @transform_2(%arg0: i32) -> (i32, i32) {
    %c0_i32 = arith.constant 0 : i32
    %c0_i32_0 = arith.constant 0 : i32
    %c0_i32_1 = arith.constant 0 : i32
    return %c0_i32, %c0_i32_0 : i32, i32
  }
  func.func @transform_3(%arg0: i32) -> (i32, i32) {
    %c0_i32 = arith.constant 0 : i32
    %c0_i32_0 = arith.constant 0 : i32
    return %arg0, %c0_i32 : i32, i32
  }
}

</mosaic_0001>

<llo_original>
// kernel: tpu_custom_call.1
$region0: #{tpu_custom_call.1}
  #allocation0 [shape = 'u32[]', space=smem, size = 0x4, offset = 0x4, fixed_abs, tag = 'smem constant byte address 0x4 - core index']
  #allocation1 [shape = 'u32[72,128]{1,0:T(1,128)}', space=vmem, size = 0x9000, scoped, tag = 'internal scratch']
  %s0 = inlined_call_operand.hbm [shape: f32[4,128], index: 0, kind: input, shape index: {}]
  %s1 = inlined_call_operand.hbm [shape: f32[1,128], index: 1, kind: input, shape index: {}]
  %s2 = inlined_call_operand.hbm [shape: f32[128,128], index: 2, kind: input, shape index: {}]
  %s3 = inlined_call_operand.hbm [shape: f32[4,128], index: 3, kind: output, shape index: {}]
  %s4 = sld [smem:[#allocation0]]
  $region34: #{tpu_custom_call.1} parent=0
    _
  %s6 = ssub.s32 1, %s4
  %s7 = scalar_select 0, %s6, %s4
  $region1: #{tpu_custom_call.1} parent=0
    #allocation2 [shape = 'u8[2048]{0}', space=vmem, size = 0x800, scoped, tag = 'input window, operand 0, single buffered']
    #allocation3 [shape = 's32[1]{0}', space=sflag, size = 0x4, scoped, tag = 'scoped memory for tpu_custom_call.1']
    #allocation4 [shape = 's32[1]{0}', space=sflag, size = 0x4, scoped, tag = 'scoped memory for tpu_custom_call.1']
    #allocation5 [shape = 'u8[512]{0}', space=vmem, size = 0x400, scoped, tag = 'input window, operand 1, single buffered']
    #allocation6 [shape = 's32[1]{0}', space=sflag, size = 0x4, scoped, tag = 'scoped memory for tpu_custom_call.1']
    #allocation7 [shape = 'u8[65536]{0}', space=vmem, size = 0x10000, scoped, tag = 'input window, operand 2, single buffered']
    #allocation8 [shape = 'u8[2048]{0}', space=vmem, size = 0x800, scoped, tag = 'output window, operand 0, single buffered']
    %8 = vsyncpa [#allocation3], 0
    %9 = vsyncpa [#allocation6], 0
    %10 = vsyncpa [#allocation4], 0
    // Predicated region
    $region2: #{tpu_custom_call.1} parent=1 // pred_check
      _
    $region3: #{tpu_custom_call.1} parent=1 // pred_check_branch
      %12 = sbr.rel (0) target = $region5
    $region4: #{tpu_custom_call.1} parent=1 // pred_region
      %14 = vsyncadd [#allocation3], 0
      %s16 = sshll.u32 %s0, 4
      %s17 = int_to_ptr.hbm [resolvable:$true] %s16
      %s18 = sshll.u32 [#allocation2], 4
      %s19 = int_to_ptr.vmem [resolvable:$true] %s18
      %21 = dma.hbm_to_vmem [thread:$0]  %s17, 64, %s19, [#allocation3]
    $region5: #{tpu_custom_call.1} parent=1 // pred_fallthru
      _
    // Predicated region
    $region6: #{tpu_custom_call.1} parent=1 // pred_check
      _
    $region7: #{tpu_custom_call.1} parent=1 // pred_check_branch
      %23 = sbr.rel (0) target = $region9
    $region8: #{tpu_custom_call.1} parent=1 // pred_region
      %25 = vsyncadd [#allocation6], 0
      %s27 = sshll.u32 %s1, 4
      %s28 = int_to_ptr.hbm [resolvable:$true] %s27
      %s29 = sshll.u32 [#allocation5], 4
      %s30 = int_to_ptr.vmem [resolvable:$true] %s29
      %32 = dma.hbm_to_vmem [thread:$0]  %s28, 16, %s30, [#allocation6]
    $region9: #{tpu_custom_call.1} parent=1 // pred_fallthru
      _
    // Predicated region
    $region10: #{tpu_custom_call.1} parent=1 // pred_check
      _
    $region11: #{tpu_custom_call.1} parent=1 // pred_check_branch
      %34 = sbr.rel (0) target = $region13
    $region12: #{tpu_custom_call.1} parent=1 // pred_region
      %36 = vsyncadd [#allocation6], 0
      %s37 = sshll.u32 %s2, 4
      %s38 = int_to_ptr.hbm [resolvable:$true] %s37
      %s39 = sshll.u32 [#allocation7], 4
      %s40 = int_to_ptr.vmem [resolvable:$true] %s39
      %45 = dma.hbm_to_vmem [thread:$0]  %s38, 2048, %s40, [#allocation6], 128, 128, 8
    $region13: #{tpu_custom_call.1} parent=1 // pred_fallthru
      _
    // Predicated region
    $region14: #{tpu_custom_call.1} parent=1 // pred_check
      _
    $region15: #{tpu_custom_call.1} parent=1 // pred_check_branch
      %47 = sbr.rel (0) target = $region17
    $region16: #{tpu_custom_call.1} parent=1 // pred_region
      %49 = dma.done [#allocation3], 64
    $region17: #{tpu_custom_call.1} parent=1 // pred_fallthru
      _
    // Predicated region
    $region18: #{tpu_custom_call.1} parent=1 // pred_check
      _
    $region19: #{tpu_custom_call.1} parent=1 // pred_check_branch
      %51 = sbr.rel (0) target = $region21
    $region20: #{tpu_custom_call.1} parent=1 // pred_region
      %53 = dma.done [#allocation6], 16
    $region21: #{tpu_custom_call.1} parent=1 // pred_fallthru
      _
    // Predicated region
    $region22: #{tpu_custom_call.1} parent=1 // pred_check
      _
    $region23: #{tpu_custom_call.1} parent=1 // pred_check_branch
      %55 = sbr.rel (0) target = $region25
    $region24: #{tpu_custom_call.1} parent=1 // pred_region
      %57 = dma.done [#allocation6], 2048
    $region25: #{tpu_custom_call.1} parent=1 // pred_fallthru
      _
    %v58 = vld [vmem:[#allocation2] sm:$0xf]
    %v59 = vmul.f32 %v58, %v58
    %v60 = vld [vmem:[#allocation7] sm:$0xff]
    %v61 = vld [vmem:[#allocation7 + $0x8] sm:$0xff]
    %v62 = vld [vmem:[#allocation7 + $0x10] sm:$0xff]
    %v63 = vld [vmem:[#allocation7 + $0x18] sm:$0xff]
    %v64 = vld [vmem:[#allocation7 + $0x20] sm:$0xff]
    %v65 = vld [vmem:[#allocation7 + $0x28] sm:$0xff]
    %v66 = vld [vmem:[#allocation7 + $0x30] sm:$0xff]
    %v67 = vld [vmem:[#allocation7 + $0x38] sm:$0xff]
    %v68 = vld [vmem:[#allocation7 + $0x40] sm:$0xff]
    %v69 = vld [vmem:[#allocation7 + $0x48] sm:$0xff]
    %v70 = vld [vmem:[#allocation7 + $0x50] sm:$0xff]
    %v71 = vld [vmem:[#allocation7 + $0x58] sm:$0xff]
    %v72 = vld [vmem:[#allocation7 + $0x60] sm:$0xff]
    %v73 = vld [vmem:[#allocation7 + $0x68] sm:$0xff]
    %v74 = vld [vmem:[#allocation7 + $0x70] sm:$0xff]
    %v75 = vld [vmem:[#allocation7 + $0x78] sm:$0xff]
    %76 = vmatpush.msra.mxu0 %v75
    %77 = vmatpush.msra.mxu0 %v74
    %78 = vmatpush.msra.mxu0 %v73
    %79 = vmatpush.msra.mxu0 %v72
    %80 = vmatpush.msra.mxu0 %v71
    %81 = vmatpush.msra.mxu0 %v70
    %82 = vmatpush.msra.mxu0 %v69
    %83 = vmatpush.msra.mxu0 %v68
    %84 = vmatpush.msra.mxu0 %v67
    %85 = vmatpush.msra.mxu0 %v66
    %86 = vmatpush.msra.mxu0 %v65
    %87 = vmatpush.msra.mxu0 %v64
    %88 = vmatpush.msra.mxu0 %v63
    %89 = vmatpush.msra.mxu0 %v62
    %90 = vmatpush.msra.mxu0 %v61
    %91 = vmatpush.msra.mxu0 %v60
    %92 = vmatmul.f32.gmra.mxu0 %v59
    %v93 = vpop.f32.mrf.mxu0
    %v94 = vadd.f32 0.0, %v93
    %95 = vdwg.mxu0
    %v96 = vmul.f32 %v94, 0.03125
    %v97 = vadd.f32 %v96, 1e-06
    %v98 = vrsqrt.pop %v97
    %v99 = vmul.f32 %v98, %v97
    %v100 = vmul.f32 %v99, %v98
    %v101 = vmul.f32 0.5, %v100
    %v102 = vsub.f32 1.5, %v101
    %v103 = vmul.f32 %v98, %v102
    %vm104 = vweird.f32 %v97
    %vm105 = vweird.f32 %v98
    %vm106 = vmor %vm104, %vm105
    %v107 = vsel %vm106, %v98, %v103
    %v108 = vmul.f32 %v58, %v107
    %v109 = vld [vmem:[#allocation5] sm:$0x1]
    %v111 = vperm.slane %v109, 0
    %v113 = vmul.f32 %v108, %v111
    %114 = vst [vmem:[#allocation8] sm:$0xf] %v113
    // Predicated region
    $region26: #{tpu_custom_call.1} parent=1 // pred_check
      _
    $region27: #{tpu_custom_call.1} parent=1 // pred_check_branch
      %116 = sbr.rel (0) target = $region29
    $region28: #{tpu_custom_call.1} parent=1 // pred_region
      %118 = vsyncadd [#allocation4], 0
      %s120 = sshll.u32 [#allocation8], 4
      %s121 = int_to_ptr.vmem [resolvable:$true] %s120
      %s122 = sshll.u32 %s3, 4
      %s123 = int_to_ptr.hbm [resolvable:$true] %s122
      %125 = dma.vmem_to_hbm [thread:$0]  %s121, 64, %s123, [#allocation4]
    $region29: #{tpu_custom_call.1} parent=1 // pred_fallthru
      _
    // Predicated region
    $region30: #{tpu_custom_call.1} parent=1 // pred_check
      _
    $region31: #{tpu_custom_call.1} parent=1 // pred_check_branch
      %127 = sbr.rel (0) target = $region33
    $region32: #{tpu_custom_call.1} parent=1 // pred_region
      %129 = dma.done [#allocation4], 64
    $region33: #{tpu_custom_call.1} parent=1 // pred_fallthru
      _
    %130 = vsyncpa [#allocation3], 1
    %131 = vsyncpa [#allocation6], 1
    %132 = vsyncpa [#allocation4], 1

</llo_original>
